<compile_context>
chip_gen: v5e
topology: v5e:2x2
jax: 0.10.0
libtpu: 0.0.40
codegen_flags: <defaults>
</compile_context>

<pallas_src>
import jax
import jax.numpy as jnp
from jax.experimental import pallas as pl
from jax.experimental.pallas import tpu as pltpu

_LANES = 128
_MIB = 1024 * 1024


def _round_up(v, m):
    return (v + m - 1) // m * m


def _largest_divisor_leq(n, cap):
    cap = max(1, min(n, cap))
    for d in range(cap, 0, -1):
        if n % d == 0:
            return d
    return 1


def _chip_budgets():
    """Returns (fused_block_budget_bytes, vmem_limit_bytes, multi_tensorcore)."""
    kind = ""
    try:
        kind = jax.devices()[0].device_kind.lower()
    except Exception:
        pass
    vmem_cap = None
    try:
        vmem_cap = int(getattr(pltpu.get_tpu_info(), "vmem_capacity_bytes", 0)) or None
    except Exception:
        pass
    is_v7 = ("v7" in kind) or (vmem_cap is not None and vmem_cap <= 64 * _MIB)
    if is_v7:
        # v7x: 64 MiB VMEM per TensorCore, 2 TCs.  ~6 MiB blocks amortize the
        # ~0.35us/step overhead against ~3.2 TB/s HBM while
        # (2 in + 2 out + temporaries) stays well under 64 MiB.
        return 6 * _MIB, 48 * _MIB, True
    if "v5" in kind:
        # v5e: already near the HBM roofline plateau at a few MiB per block;
        # the win is keeping shapes on the fused path (128 MiB physical VMEM).
        return 8 * _MIB, 112 * _MIB, False
    # v6e (and unknown default): 128 MiB physical VMEM, single TensorCore.
    return 16 * _MIB, 112 * _MIB, False


# ---------------------------------------------------------------------------
# Fused path: exactly one read + one write of x.
# ---------------------------------------------------------------------------
def _fused_kernel(x_ref, o_ref):
    """(bb, C, N) block: channel-max -> softmax over N -> broadcast multiply.

    Only the (bb, 1, N) softmax path is materialized in f32; the bulk block is
    read straight from x_ref in its native dtype (the max is dtype-exact).
    """
    m = jnp.max(x_ref[...], axis=1, keepdims=True).astype(jnp.float32)   # (bb,1,N)
    mm = jnp.max(m, axis=-1, keepdims=True)                              # (bb,1,1)
    e = jnp.exp(m - mm)                                                  # (bb,1,N)
    s = e * pl.reciprocal(jnp.sum(e, axis=-1, keepdims=True), approx=False)
    # f32 (bb,1,N) weights broadcast against native-dtype x; result cast back.
    o_ref[...] = (s * x_ref[...]).astype(o_ref.dtype)


def _fused_path(x, bb, vmem_limit):
    B, C, N = x.shape
    return pl.pallas_call(
        _fused_kernel,
        out_shape=jax.ShapeDtypeStruct((B, C, N), x.dtype),
        grid_spec=pltpu.PrefetchScalarGridSpec(
            num_scalar_prefetch=0,
            grid=(B // bb,),
            # Last two block dims equal the full (C, N) extents -> legal for
            # any C, N; bb divides B -> no padding and no output slice.
            in_specs=[pl.BlockSpec((bb, C, N), lambda b: (b, 0, 0))],
            out_specs=pl.BlockSpec((bb, C, N), lambda b: (b, 0, 0)),
        ),
        compiler_params=pltpu.CompilerParams(
            dimension_semantics=("parallel",),
            vmem_limit_bytes=vmem_limit),
    )(x)


# ---------------------------------------------------------------------------
# Two-pass fallback.  NOTE: pass 1 re-reads the full (B, C, N) tensor, so this
# path costs ~1.5x the fused path's HBM traffic.  It is only used when a
# (C, N) slab cannot sit double-buffered in VMEM, or to split B == 1 work
# across both v7x TensorCores.
# ---------------------------------------------------------------------------
def _apply_kernel(s_ref, x_ref, o_ref):
    """s_ref: (1, n_steps, tn) resident per-row weights; x/o: (1, C, tn) tile."""
    n = pl.program_id(1)
    s = s_ref[:, pl.ds(n, 1), :]                          # (1, 1, tn) f32
    o_ref[...] = (s * x_ref[...]).astype(o_ref.dtype)


def _two_pass_path(x, block_budget, vmem_limit, min_n_steps):
    B, C, N = x.shape
    itemsize = jnp.dtype(x.dtype).itemsize

    # Pass 1: softmax weights in plain XLA (reads x once, writes the tiny s).
    m = jnp.max(x, axis=1, keepdims=True).astype(jnp.float32)   # (B, 1, N)
    s = jax.nn.softmax(m, axis=-1)                              # (B, 1, N) f32

    # Lane-dense N tile: in + out x tiles (native dtype) + f32 product temp.
    per_lane = C * (2 * itemsize + 4) + 4
    tn = (block_budget // per_lane) // _LANES * _LANES
    tn = max(_LANES, min(_round_up(N, _LANES), tn))
    if min_n_steps > 1:
        # Guarantee >= min_n_steps grid steps along N (both v7x TCs get work).
        tn = min(tn, max(_LANES, _round_up(pl.cdiv(N, min_n_steps), _LANES)))
    n_steps = pl.cdiv(N, tn)

    # Keep the whole per-row weight vector resident in VMEM (one DMA per batch
    # row) instead of a tiny DMA every (b, n) step.  Padding / reshaping s is
    # cheap (it is ~1/C the size of x) and never touches x itself.
    ns_pad = n_steps * tn
    if ns_pad != N:
        s = jnp.pad(s, ((0, 0), (0, 0), (0, ns_pad - N)))
    s = s.reshape(B, n_steps, tn)

    return pl.pallas_call(
        _apply_kernel,
        out_shape=jax.ShapeDtypeStruct((B, C, N), x.dtype),
        grid_spec=pltpu.PrefetchScalarGridSpec(
            num_scalar_prefetch=0,
            grid=(B, n_steps),
            in_specs=[pl.BlockSpec((1, n_steps, tn), lambda b, n: (b, 0, 0)),
                      pl.BlockSpec((1, C, tn), lambda b, n: (b, 0, n))],
            out_specs=pl.BlockSpec((1, C, tn), lambda b, n: (b, 0, n)),
        ),
        compiler_params=pltpu.CompilerParams(
            dimension_semantics=("parallel", "parallel"),
            vmem_limit_bytes=vmem_limit),
    )(s, x)


def singular_spectrum_operator(x, L=30, Ip=2, *, max_fused_block_bytes=None):
    """softmax(SSA_groups1(max(x, 1)), -1) * x  ==  softmax(max(x, 1), -1) * x.

    x: (B, C, N).  L / Ip kept for API parity with the nn.Module (unused:
    SSA with groups=1 is an exact reconstruction for any window size L).
    """
    del L, Ip
    B, C, N = x.shape
    block_budget, vmem_limit, multi_tc = _chip_budgets()
    if max_fused_block_bytes is not None:
        block_budget = max_fused_block_bytes

    itemsize = jnp.dtype(x.dtype).itemsize
    per_row = C * N * itemsize            # streamed bytes per batch row (dtype-aware)
    min_n_steps = 2 if multi_tc else 1

    if per_row > block_budget:
        # A (C, N) slab is too big to double-buffer in VMEM: decouple the
        # softmax weights from the bulk broadcast multiply.
        return _two_pass_path(x, block_budget, vmem_limit, min_n_steps)
    if multi_tc and B == 1 and per_row >= _MIB:
        # A single fused grid step would leave one v7x TensorCore idle; split
        # the work along N instead.
        return _two_pass_path(x, block_budget, vmem_limit, min_n_steps=2)

    bb_cap = max(1, block_budget // per_row)
    if multi_tc and B >= 2:
        bb_cap = min(bb_cap, B // 2)      # keep >= 2 parallel steps for 2 TCs
    bb = _largest_divisor_leq(B, bb_cap)  # divides B: no batch padding/slice
    return _fused_path(x, bb, vmem_limit)


def _reference(x):
    m = jnp.max(x.astype(jnp.float32), axis=1, keepdims=True)
    s = jax.nn.softmax(m, axis=-1)
    return (s * x.astype(jnp.float32)).astype(x.dtype)


if __name__ == "__main__":
    key = jax.random.PRNGKey(0)
    k1, k2, k3 = jax.random.split(key, 3)

    # 1) N not a multiple of 128: fused path, full-(C, N) block, no padding.
    x1 = jax.random.normal(k1, (2, 4, 100), dtype=jnp.float32)
    o1 = jax.block_until_ready(singular_spectrum_operator(x1))
    assert o1.shape == x1.shape
    assert jnp.allclose(o1, _reference(x1), atol=1e-5, rtol=1e-5)

    # 2) larger batch: several batch rows per grid step (bb divides B).
    x2 = jax.random.normal(k2, (8, 4, 256), dtype=jnp.float32)
    o2 = jax.block_until_ready(singular_spectrum_operator(x2))
    assert jnp.allclose(o2, _reference(x2), atol=1e-5, rtol=1e-5)

    # 3) force the two-pass fallback (resident weights + lane-dense N tiling,
    #    including a ragged last N tile).
    x3 = jax.random.normal(k3, (2, 4, 300), dtype=jnp.float32)
    o3 = jax.block_until_ready(
        singular_spectrum_operator(x3, max_fused_block_bytes=1))
    assert o3.shape == x3.shape
    assert jnp.allclose(o3, _reference(x3), atol=1e-5, rtol=1e-5)

    print("KERNEL_OK")
</pallas_src>

<mosaic_0001>
module attributes {stable_mosaic.version = 11 : i64} {
  func.func @_fused_kernel(%arg0: i32, %arg1: memref<2x4x100xf32, #tpu.memory_space<vmem>>, %arg2: memref<2x4x100xf32, #tpu.memory_space<vmem>>) attributes {dimension_semantics = [#tpu.dimension_semantics<parallel>], iteration_bounds = array<i64: 1>, scalar_prefetch = 0 : i64, scratch_operands = 0 : i64, tpu.core_type = #tpu.core_type<tc>, window_params = [{transform_indices = @transform_0, window_bounds = array<i64: 2, 4, 100>}, {transform_indices = @transform_1, window_bounds = array<i64: 2, 4, 100>}]} {
    %c0 = arith.constant 0 : index
    %c0_0 = arith.constant 0 : index
    %c0_1 = arith.constant 0 : index
    %0 = vector.load %arg1[%c0, %c0_0, %c0_1] : memref<2x4x100xf32, #tpu.memory_space<vmem>>, vector<2x4x100xf32>
    %cst = arith.constant dense<0xFF800000> : vector<2x100xf32>
    %1 = vector.multi_reduction <maximumf>, %0, %cst [1] : vector<2x4x100xf32> to vector<2x100xf32>
    %2 = vector.shape_cast %1 : vector<2x100xf32> to vector<2x1x100xf32>
    %cst_2 = arith.constant dense<0xFF800000> : vector<2x1xf32>
    %3 = vector.multi_reduction <maximumf>, %2, %cst_2 [2] : vector<2x1x100xf32> to vector<2x1xf32>
    %4 = vector.shape_cast %3 : vector<2x1xf32> to vector<2x1x1xf32>
    %5 = vector.broadcast %4 : vector<2x1x1xf32> to vector<2x1x100xf32>
    %6 = arith.subf %2, %5 : vector<2x1x100xf32>
    %7 = math.exp %6 : vector<2x1x100xf32>
    %cst_3 = arith.constant dense<0.000000e+00> : vector<2x1xf32>
    %8 = vector.multi_reduction <add>, %7, %cst_3 [2] : vector<2x1x100xf32> to vector<2x1xf32>
    %9 = vector.shape_cast %8 : vector<2x1xf32> to vector<2x1x1xf32>
    %10 = tpu.reciprocal %9 : vector<2x1x1xf32> -> vector<2x1x1xf32>
    %11 = vector.broadcast %10 : vector<2x1x1xf32> to vector<2x1x100xf32>
    %12 = arith.mulf %7, %11 : vector<2x1x100xf32>
    %c0_4 = arith.constant 0 : index
    %c0_5 = arith.constant 0 : index
    %c0_6 = arith.constant 0 : index
    %13 = vector.load %arg1[%c0_4, %c0_5, %c0_6] : memref<2x4x100xf32, #tpu.memory_space<vmem>>, vector<2x4x100xf32>
    %14 = vector.broadcast %12 : vector<2x1x100xf32> to vector<2x4x100xf32>
    %15 = arith.mulf %14, %13 : vector<2x4x100xf32>
    %c0_7 = arith.constant 0 : index
    %c0_8 = arith.constant 0 : index
    %c0_9 = arith.constant 0 : index
    %16 = vector.load %arg2[%c0_7, %c0_8, %c0_9] : memref<2x4x100xf32, #tpu.memory_space<vmem>>, vector<2x4x100xf32>
    tpu.vector_store %arg2[%c0_7, %c0_8, %c0_9], %15 {strides = array<i32>} : memref<2x4x100xf32, #tpu.memory_space<vmem>>, vector<2x4x100xf32>,
    return
  }
  func.func @transform_0(%arg0: i32) -> (i32, i32, i32) {
    %c0_i32 = arith.constant 0 : i32
    %c0_i32_0 = arith.constant 0 : i32
    %c0_i32_1 = arith.constant 0 : i32
    return %arg0, %c0_i32, %c0_i32_0 : i32, i32, i32
  }
  func.func @transform_1(%arg0: i32) -> (i32, i32, i32) {
    %c0_i32 = arith.constant 0 : i32
    %c0_i32_0 = arith.constant 0 : i32
    %c0_i32_1 = arith.constant 0 : i32
    return %arg0, %c0_i32, %c0_i32_0 : i32, i32, i32
  }
}

</mosaic_0001>

<llo_original>
// kernel: tpu_custom_call.1
$region0: #{tpu_custom_call.1}
  #allocation0 [shape = 'u32[]', space=smem, size = 0x4, offset = 0x4, fixed_abs, tag = 'smem constant byte address 0x4 - core index']
  #allocation1 [shape = 'u32[72,128]{1,0:T(1,128)}', space=vmem, size = 0x9000, scoped, tag = 'internal scratch']
  %s0 = inlined_call_operand.hbm [shape: f32[2,4,100], index: 0, kind: input, shape index: {}]
  %s1 = inlined_call_operand.hbm [shape: f32[2,4,100], index: 1, kind: output, shape index: {}]
  %s2 = sld [smem:[#allocation0]]
  $region18: #{tpu_custom_call.1} parent=0
    _
  %s4 = ssub.s32 1, %s2
  %s5 = scalar_select 0, %s4, %s2
  $region1: #{tpu_custom_call.1} parent=0
    #allocation2 [shape = 'u8[4096]{0}', space=vmem, size = 0x1000, scoped, tag = 'input window, operand 0, single buffered']
    #allocation3 [shape = 's32[1]{0}', space=sflag, size = 0x4, scoped, tag = 'scoped memory for tpu_custom_call.1']
    #allocation4 [shape = 's32[1]{0}', space=sflag, size = 0x4, scoped, tag = 'scoped memory for tpu_custom_call.1']
    #allocation5 [shape = 'u8[4096]{0}', space=vmem, size = 0x1000, scoped, tag = 'output window, operand 0, single buffered']
    %6 = vsyncpa [#allocation3], 0
    %7 = vsyncpa [#allocation4], 0
    // Predicated region
    $region2: #{tpu_custom_call.1} parent=1 // pred_check
      _
    $region3: #{tpu_custom_call.1} parent=1 // pred_check_branch
      %9 = sbr.rel (0) target = $region5
    $region4: #{tpu_custom_call.1} parent=1 // pred_region
      %11 = vsyncadd [#allocation3], 0
      %s12 = sshll.u32 %s0, 4
      %s13 = int_to_ptr.hbm [resolvable:$true] %s12
      %s14 = sshll.u32 [#allocation2], 4
      %s15 = int_to_ptr.vmem [resolvable:$true] %s14
      %20 = dma.hbm_to_vmem [thread:$0]  %s13, 128, %s15, [#allocation3], 64, 64, 4
    $region5: #{tpu_custom_call.1} parent=1 // pred_fallthru
      _
    // Predicated region
    $region6: #{tpu_custom_call.1} parent=1 // pred_check
      _
    $region7: #{tpu_custom_call.1} parent=1 // pred_check_branch
      %22 = sbr.rel (0) target = $region9
    $region8: #{tpu_custom_call.1} parent=1 // pred_region
      %24 = dma.done [#allocation3], 128
    $region9: #{tpu_custom_call.1} parent=1 // pred_fallthru
      _
    %v25 = vld [vmem:[#allocation2] sm:$0xf]
    %v26 = vld [vmem:[#allocation2 + $0x4] sm:$0xf]
    %vm27 = vcmask 814080
    %v28 = vsel %vm27, %v25, -inf
    %v29 = vrot.slane %v28, 4
    %v30 = vmax.f32 %v28, %v29
    %v31 = vrot.slane %v30, 2
    %v32 = vmax.f32 %v30, %v31
    %v33 = vrot.slane %v32, 1
    %v34 = vmax.f32 %v32, %v33
    %v35 = vsel %vm27, %v26, -inf
    %v36 = vrot.slane %v35, 4
    %v37 = vmax.f32 %v35, %v36
    %v38 = vrot.slane %v37, 2
    %v39 = vmax.f32 %v37, %v38
    %v40 = vrot.slane %v39, 1
    %v41 = vmax.f32 %v39, %v40
    %vm42 = vcmask 818176
    %v43 = vsel %vm42, %v34, -inf
    %44 = vmax.xlane.f32.xlu0 %v43
    %v45 = vpop.xlane.xlu0 %44
    %v46 = vsel %vm42, %v41, -inf
    %47 = vmax.xlane.f32.xlu0 %v46
    %v48 = vpop.xlane.xlu0 %47
    %v49 = vsub.f32 %v34, %v45
    %v50 = vsub.f32 %v41, %v48
    %v51 = vmul.f32 %v49, 1.442695
    %v52 = vpow.pop %v51
    %v53 = vmul.f32 %v50, 1.442695
    %v54 = vpow.pop %v53
    %v55 = vsel %vm42, %v52, 0.0
    %56 = vadd.xlane.f32.xlu0 %v55
    %v57 = vpop.xlane.xlu0 %56
    %v58 = vsel %vm42, %v54, 0.0
    %59 = vadd.xlane.f32.xlu0 %v58
    %v60 = vpop.xlane.xlu0 %59
    %v61 = vrcp.pop %v57
    %v62 = vmul.f32 %v57, %v61
    %v63 = vsub.f32 1.0, %v62
    %v64 = vmul.f32 %v61, %v63
    %v65 = vadd.f32 %v61, %v64
    %vm66 = vweird.f32 %v57
    %vm67 = vweird.f32 %v61
    %vm68 = vmor %vm66, %vm67
    %v69 = vsel %vm68, %v61, %v65
    %v70 = vand.u32 2147483647, %v57
    %vm71 = vcmp.eq.f32.partialorder %v70, 8.507059e+37
    %v72 = vand.u32 %v57, 2147483648
    %v73 = vor.u32 1.1754944e-38, %v72
    %v74 = vsel %vm71, %v73, %v69
    %v75 = vrcp.pop %v60
    %v76 = vmul.f32 %v60, %v75
    %v77 = vsub.f32 1.0, %v76
    %v78 = vmul.f32 %v75, %v77
    %v79 = vadd.f32 %v75, %v78
    %vm80 = vweird.f32 %v60
    %vm81 = vweird.f32 %v75
    %vm82 = vmor %vm80, %vm81
    %v83 = vsel %vm82, %v75, %v79
    %v84 = vand.u32 2147483647, %v60
    %vm85 = vcmp.eq.f32.partialorder %v84, 8.507059e+37
    %v86 = vand.u32 %v60, 2147483648
    %v87 = vor.u32 1.1754944e-38, %v86
    %v88 = vsel %vm85, %v87, %v83
    %v89 = vmul.f32 %v52, %v74
    %v90 = vmul.f32 %v54, %v88
    %v91 = vmul.f32 %v89, %v25
    %v92 = vmul.f32 %v90, %v26
    %93 = vst.msk [vmem:[#allocation5] sm:$0xf] %vm27, %v91
    %94 = vst.msk [vmem:[#allocation5 + $0x4] sm:$0xf] %vm27, %v92
    // Predicated region
    $region10: #{tpu_custom_call.1} parent=1 // pred_check
      _
    $region11: #{tpu_custom_call.1} parent=1 // pred_check_branch
      %96 = sbr.rel (0) target = $region13
    $region12: #{tpu_custom_call.1} parent=1 // pred_region
      %98 = vsyncadd [#allocation4], 0
      %s99 = sshll.u32 [#allocation5], 4
      %s100 = int_to_ptr.vmem [resolvable:$true] %s99
      %s101 = sshll.u32 %s1, 4
      %s102 = int_to_ptr.hbm [resolvable:$true] %s101
      %107 = dma.vmem_to_hbm [thread:$0]  %s100, 128, %s102, [#allocation4], 64, 64, 4
    $region13: #{tpu_custom_call.1} parent=1 // pred_fallthru
      _
    // Predicated region
    $region14: #{tpu_custom_call.1} parent=1 // pred_check
      _
    $region15: #{tpu_custom_call.1} parent=1 // pred_check_branch
      %109 = sbr.rel (0) target = $region17
    $region16: #{tpu_custom_call.1} parent=1 // pred_region
      %111 = dma.done [#allocation4], 128
    $region17: #{tpu_custom_call.1} parent=1 // pred_fallthru
      _
    %112 = vsyncpa [#allocation3], 1
    %113 = vsyncpa [#allocation4], 1

</llo_original>
